<compile_context>
chip_gen: v7x
topology: tpu7x:2x2x1
jax: 0.10.0
libtpu: 0.0.40
codegen_flags: <defaults>
</compile_context>

<pallas_src>
import math

import jax
import jax.numpy as jnp
import numpy as np
from jax.experimental import pallas as pl
from jax.experimental.pallas import tpu as pltpu


def _gelu_exact(x):
    # Matches torch.nn.GELU() default (erf-based, exact).
    return 0.5 * x * (1.0 + jax.lax.erf(x * (1.0 / math.sqrt(2.0))))


def _round_up(x, m):
    return ((x + m - 1) // m) * m


def mask_decoder_kernel(c_ref,    # (1,)   SMEM: softmax weight c0
                        x_ref,    # (TN,D) raw input rows
                        w1_ref,   # (E, D) fc1 weight pre-scaled by gamma
                        w2_ref,   # (E, E) fc2 weight
                        w3_ref,   # (E, E) c2*fc3_w + c1*I  (combine folded in)
                        k_ref,    # (E, 4) [b1' | b2 | c2*b3 | rowsum(w1')]
                        o_ref):   # (TN,E) output tile in module layout
    x = x_ref[...].astype(jnp.float32)                       # (TN, D)
    d = x.shape[-1]

    # LayerNorm statistics, computed directly in lane-dense (1, TN) orientation
    # via two tiny MXU contractions (the MXU slot is idle in this kernel).
    inv_d = jnp.full((1, d), 1.0 / d, dtype=jnp.float32)
    mean_r = jax.lax.dot_general(inv_d, x, (((1,), (1,)), ((), ())),
                                 preferred_element_type=jnp.float32)   # (1, TN)
    msq_r = jax.lax.dot_general(inv_d, x * x, (((1,), (1,)), ((), ())),
                                preferred_element_type=jnp.float32)    # (1, TN)
    rstd_r = jax.lax.rsqrt(msq_r - mean_r * mean_r + 1e-5)             # (1, TN)

    # fc1 with LayerNorm folded in.  From here on everything is (E, TN):
    # rows ride the 128-lane axis, so all elementwise work is lane-dense.
    g = jax.lax.dot_general(w1_ref[...], x, (((1,), (1,)), ((), ())),
                            preferred_element_type=jnp.float32)        # (E, TN)
    h1 = (g - k_ref[:, 3:4] * mean_r) * rstd_r + k_ref[:, 0:1]
    s1 = _gelu_exact(h1)                                               # (E, TN)

    s2 = _gelu_exact(jnp.dot(w2_ref[...], s1,
                             preferred_element_type=jnp.float32) + k_ref[:, 1:2])

    # w3_ref already contains c2*fc3_w + c1*I, so this matmul also applies the
    # c1*s2 term of the softmax-weighted combine; only c0*s1 remains.
    out = jnp.dot(w3_ref[...], s2,
                  preferred_element_type=jnp.float32) + k_ref[:, 2:3]
    out = out + c_ref[0] * s1                                          # (E, TN)

    # Flip back to the module's (rows, experts) layout in-kernel (XLU slot is
    # otherwise idle) so the wrapper needs no extra HBM transpose pass.
    o_ref[...] = out.T.astype(o_ref.dtype)


def _pick_row_tile(n, max_row_tile):
    """Multiple-of-128 row tile: big enough to amortize the ~0.35 us/step grid
    overhead, but capped so large problems still get >=4 grid steps (lets the
    'parallel' axis shard across v7x's two TensorCores)."""
    assert max_row_tile % 128 == 0
    if n <= 128:
        return 128
    target = _round_up(-(-n // 4), 128)
    return max(128, min(max_row_tile, target))


def mask_decoder_forward(sL, params, *, max_row_tile=2048):
    """sL: (B, S, D) float32.  Returns (B, S, E) float32."""
    B, S, D = sL.shape
    E = params["fc1_w"].shape[0]            # PyTorch linear weight is (out, in)
    N = B * S

    row_tile = _pick_row_tile(N, max_row_tile)
    Npad = _round_up(N, row_tile)
    grid = (Npad // row_tile,)

    x2d = sL.reshape(N, D).astype(jnp.float32)
    if Npad != N:
        x2d = jnp.pad(x2d, ((0, Npad - N), (0, 0)))   # zero rows, sliced off later

    f32 = jnp.float32
    c = jax.nn.softmax(params["weight_logits"].astype(f32), axis=0)
    gamma = params["ln_w"].astype(f32)
    beta = params["ln_b"].astype(f32)
    fc1_w = params["fc1_w"].astype(f32)

    # Fold LayerNorm affine into fc1; fold c1/c2 of the combine into fc3.
    w1p = fc1_w * gamma[None, :]                               # (E, D)
    b1p = fc1_w @ beta + params["fc1_b"].astype(f32)           # (E,)
    w1s = jnp.sum(w1p, axis=1)                                 # (E,) rowsum(w1')
    w2 = params["fc2_w"].astype(f32)                           # (E, E)
    b2 = params["fc2_b"].astype(f32)                           # (E,)
    w3f = c[2] * params["fc3_w"].astype(f32) + c[1] * jnp.eye(E, dtype=f32)
    b3f = c[2] * params["fc3_b"].astype(f32)
    kmat = jnp.stack([b1p, b2, b3f, w1s], axis=1)              # (E, 4)
    c0 = c[0:1]                                                # (1,) -> SMEM

    out = pl.pallas_call(
        mask_decoder_kernel,
        out_shape=jax.ShapeDtypeStruct((Npad, E), jnp.float32),
        grid=grid,
        in_specs=[
            pl.BlockSpec(memory_space=pltpu.SMEM),            # c0 (1,)
            pl.BlockSpec((row_tile, D), lambda i: (i, 0)),    # x rows
            pl.BlockSpec((E, D), lambda i: (0, 0)),           # folded fc1 weight
            pl.BlockSpec((E, E), lambda i: (0, 0)),           # fc2 weight
            pl.BlockSpec((E, E), lambda i: (0, 0)),           # folded fc3 weight
            pl.BlockSpec((E, 4), lambda i: (0, 0)),           # folded biases / rowsums
        ],
        out_specs=pl.BlockSpec((row_tile, E), lambda i: (i, 0)),
        compiler_params=pltpu.CompilerParams(
            dimension_semantics=("parallel",),   # rows shard across TCs on v7x
            vmem_limit_bytes=32 * 1024 * 1024,   # safe on every gen incl. v7x 64 MiB
        ),
    )(c0, x2d, w1p, w2, w3f, kmat)

    out2d = out[:N] if Npad != N else out
    return out2d.reshape(B, S, E)


def _reference_forward(sL, params):
    """Pure-JAX reference mirroring the PyTorch module."""
    x = sL.astype(jnp.float32)
    mean = jnp.mean(x, axis=-1, keepdims=True)
    var = jnp.mean((x - mean) ** 2, axis=-1, keepdims=True)
    x0 = (x - mean) / jnp.sqrt(var + 1e-5) * params["ln_w"] + params["ln_b"]
    s1 = _gelu_exact(x0 @ params["fc1_w"].T + params["fc1_b"])
    s2 = _gelu_exact(s1 @ params["fc2_w"].T + params["fc2_b"])
    s3 = s2 @ params["fc3_w"].T + params["fc3_b"]
    w = jax.nn.softmax(params["weight_logits"], axis=0)
    return w[0] * s1 + w[1] * s2 + w[2] * s3


def init_params(key, latent_dim, num_experts):
    """Deterministic synthetic parameters (shapes follow the PyTorch module)."""
    ks = jax.random.split(key, 7)

    def lin_init(k, fan_in, shape):
        bound = 1.0 / math.sqrt(fan_in)
        return jax.random.uniform(k, shape, jnp.float32, -bound, bound)

    return {
        "ln_w": jnp.ones((latent_dim,), jnp.float32),
        "ln_b": jnp.zeros((latent_dim,), jnp.float32),
        "fc1_w": lin_init(ks[0], latent_dim, (num_experts, latent_dim)),
        "fc1_b": lin_init(ks[1], latent_dim, (num_experts,)),
        "fc2_w": lin_init(ks[2], num_experts, (num_experts, num_experts)),
        "fc2_b": lin_init(ks[3], num_experts, (num_experts,)),
        "fc3_w": lin_init(ks[4], num_experts, (num_experts, num_experts)),
        "fc3_b": lin_init(ks[5], num_experts, (num_experts,)),
        "weight_logits": jax.random.normal(ks[6], (3,), jnp.float32),
    }


if __name__ == "__main__":
    batch, seq_len, latent_dim, num_experts = 2, 8, 32, 16

    key = jax.random.PRNGKey(0)
    k_param, k_x = jax.random.split(key)
    params = init_params(k_param, latent_dim, num_experts)
    sL = jax.random.normal(k_x, (batch, seq_len, latent_dim), jnp.float32)

    fwd = jax.jit(mask_decoder_forward)
    out = jax.block_until_ready(fwd(sL, params))

    ref = jax.block_until_ready(_reference_forward(sL, params))
    np.testing.assert_allclose(np.asarray(out), np.asarray(ref),
                               rtol=2e-5, atol=2e-5)

    assert out.shape == (batch, seq_len, num_experts)
    print("KERNEL_OK")
</pallas_src>

<mosaic_0001>
module attributes {stable_mosaic.version = 11 : i64} {
  func.func @mask_decoder_kernel(%arg0: i32, %arg1: memref<1xf32, #tpu.memory_space<smem>>, %arg2: memref<128x32xf32, #tpu.memory_space<vmem>>, %arg3: memref<16x32xf32, #tpu.memory_space<vmem>>, %arg4: memref<16x16xf32, #tpu.memory_space<vmem>>, %arg5: memref<16x16xf32, #tpu.memory_space<vmem>>, %arg6: memref<16x4xf32, #tpu.memory_space<vmem>>, %arg7: memref<128x16xf32, #tpu.memory_space<vmem>>) attributes {dimension_semantics = [#tpu.dimension_semantics<parallel>], iteration_bounds = array<i64: 1>, scalar_prefetch = 0 : i64, scratch_operands = 0 : i64, tpu.core_type = #tpu.core_type<tc>, window_params = [{transform_indices = @transform_0, window_bounds = array<i64: 1>}, {transform_indices = @transform_1, window_bounds = array<i64: 128, 32>}, {pipeline_mode = #tpu.pipeline_mode<synchronous>, transform_indices = @transform_2, window_bounds = array<i64: 16, 32>}, {pipeline_mode = #tpu.pipeline_mode<synchronous>, transform_indices = @transform_3, window_bounds = array<i64: 16, 16>}, {pipeline_mode = #tpu.pipeline_mode<synchronous>, transform_indices = @transform_4, window_bounds = array<i64: 16, 16>}, {pipeline_mode = #tpu.pipeline_mode<synchronous>, transform_indices = @transform_5, window_bounds = array<i64: 16, 4>}, {transform_indices = @transform_6, window_bounds = array<i64: 128, 16>}]} {
    %c0 = arith.constant 0 : index
    %c0_0 = arith.constant 0 : index
    %0 = vector.load %arg2[%c0, %c0_0] : memref<128x32xf32, #tpu.memory_space<vmem>>, vector<128x32xf32>
    %cst = arith.constant 3.125000e-02 : f32
    %1 = vector.broadcast %cst : f32 to vector<1x32xf32>
    %cst_1 = arith.constant dense<0.000000e+00> : vector<1x128xf32>
    %2 = tpu.matmul %1, %0, %cst_1 {dimension_numbers = #tpu.dot_dimension_numbers<[1], [1], [0], [0], [0, 0, 1, 0], [], []>} : vector<1x32xf32>, vector<128x32xf32>, vector<1x128xf32> -> vector<1x128xf32>
    %3 = arith.mulf %0, %0 : vector<128x32xf32>
    %cst_2 = arith.constant dense<0.000000e+00> : vector<1x128xf32>
    %4 = tpu.matmul %1, %3, %cst_2 {dimension_numbers = #tpu.dot_dimension_numbers<[1], [1], [0], [0], [0, 0, 1, 0], [], []>} : vector<1x32xf32>, vector<128x32xf32>, vector<1x128xf32> -> vector<1x128xf32>
    %5 = arith.mulf %2, %2 : vector<1x128xf32>
    %6 = arith.subf %4, %5 : vector<1x128xf32>
    %cst_3 = arith.constant 9.99999974E-6 : f32
    %7 = vector.broadcast %cst_3 : f32 to vector<1x128xf32>
    %8 = arith.addf %6, %7 : vector<1x128xf32>
    %9 = math.rsqrt %8 : vector<1x128xf32>
    %c0_4 = arith.constant 0 : index
    %c0_5 = arith.constant 0 : index
    %10 = vector.load %arg3[%c0_4, %c0_5] : memref<16x32xf32, #tpu.memory_space<vmem>>, vector<16x32xf32>
    %cst_6 = arith.constant dense<0.000000e+00> : vector<16x128xf32>
    %11 = tpu.matmul %10, %0, %cst_6 {dimension_numbers = #tpu.dot_dimension_numbers<[1], [1], [0], [0], [0, 0, 1, 0], [], []>} : vector<16x32xf32>, vector<128x32xf32>, vector<16x128xf32> -> vector<16x128xf32>
    %c0_7 = arith.constant 0 : index
    %c3 = arith.constant 3 : index
    %12 = vector.load %arg6[%c0_7, %c3] : memref<16x4xf32, #tpu.memory_space<vmem>>, vector<16x1xf32>
    %13 = vector.broadcast %12 : vector<16x1xf32> to vector<16x128xf32>
    %14 = vector.broadcast %2 : vector<1x128xf32> to vector<16x128xf32>
    %15 = arith.mulf %13, %14 : vector<16x128xf32>
    %16 = arith.subf %11, %15 : vector<16x128xf32>
    %17 = vector.broadcast %9 : vector<1x128xf32> to vector<16x128xf32>
    %18 = arith.mulf %16, %17 : vector<16x128xf32>
    %c0_8 = arith.constant 0 : index
    %c0_9 = arith.constant 0 : index
    %19 = vector.load %arg6[%c0_8, %c0_9] : memref<16x4xf32, #tpu.memory_space<vmem>>, vector<16x1xf32>
    %20 = vector.broadcast %19 : vector<16x1xf32> to vector<16x128xf32>
    %21 = arith.addf %18, %20 : vector<16x128xf32>
    %cst_10 = arith.constant 5.000000e-01 : f32
    %22 = vector.broadcast %cst_10 : f32 to vector<16x128xf32>
    %23 = arith.mulf %22, %21 : vector<16x128xf32>
    %cst_11 = arith.constant 0.707106769 : f32
    %24 = vector.broadcast %cst_11 : f32 to vector<16x128xf32>
    %25 = arith.mulf %21, %24 : vector<16x128xf32>
    %26 = math.erf %25 : vector<16x128xf32>
    %cst_12 = arith.constant 1.000000e+00 : f32
    %27 = vector.broadcast %cst_12 : f32 to vector<16x128xf32>
    %28 = arith.addf %27, %26 : vector<16x128xf32>
    %29 = arith.mulf %23, %28 : vector<16x128xf32>
    %c0_13 = arith.constant 0 : index
    %c0_14 = arith.constant 0 : index
    %30 = vector.load %arg4[%c0_13, %c0_14] : memref<16x16xf32, #tpu.memory_space<vmem>>, vector<16x16xf32>
    %cst_15 = arith.constant dense<0.000000e+00> : vector<16x128xf32>
    %31 = tpu.matmul %30, %29, %cst_15 {dimension_numbers = #tpu.dot_dimension_numbers<[1], [0], [0], [1], [0, 0, 1, 1], [], []>} : vector<16x16xf32>, vector<16x128xf32>, vector<16x128xf32> -> vector<16x128xf32>
    %c0_16 = arith.constant 0 : index
    %c1 = arith.constant 1 : index
    %32 = vector.load %arg6[%c0_16, %c1] : memref<16x4xf32, #tpu.memory_space<vmem>>, vector<16x1xf32>
    %33 = vector.broadcast %32 : vector<16x1xf32> to vector<16x128xf32>
    %34 = arith.addf %31, %33 : vector<16x128xf32>
    %cst_17 = arith.constant 5.000000e-01 : f32
    %35 = vector.broadcast %cst_17 : f32 to vector<16x128xf32>
    %36 = arith.mulf %35, %34 : vector<16x128xf32>
    %cst_18 = arith.constant 0.707106769 : f32
    %37 = vector.broadcast %cst_18 : f32 to vector<16x128xf32>
    %38 = arith.mulf %34, %37 : vector<16x128xf32>
    %39 = math.erf %38 : vector<16x128xf32>
    %cst_19 = arith.constant 1.000000e+00 : f32
    %40 = vector.broadcast %cst_19 : f32 to vector<16x128xf32>
    %41 = arith.addf %40, %39 : vector<16x128xf32>
    %42 = arith.mulf %36, %41 : vector<16x128xf32>
    %c0_20 = arith.constant 0 : index
    %c0_21 = arith.constant 0 : index
    %43 = vector.load %arg5[%c0_20, %c0_21] : memref<16x16xf32, #tpu.memory_space<vmem>>, vector<16x16xf32>
    %cst_22 = arith.constant dense<0.000000e+00> : vector<16x128xf32>
    %44 = tpu.matmul %43, %42, %cst_22 {dimension_numbers = #tpu.dot_dimension_numbers<[1], [0], [0], [1], [0, 0, 1, 1], [], []>} : vector<16x16xf32>, vector<16x128xf32>, vector<16x128xf32> -> vector<16x128xf32>
    %c0_23 = arith.constant 0 : index
    %c2 = arith.constant 2 : index
    %45 = vector.load %arg6[%c0_23, %c2] : memref<16x4xf32, #tpu.memory_space<vmem>>, vector<16x1xf32>
    %46 = vector.broadcast %45 : vector<16x1xf32> to vector<16x128xf32>
    %47 = arith.addf %44, %46 : vector<16x128xf32>
    %c0_24 = arith.constant 0 : index
    %48 = memref.load %arg1[%c0_24] : memref<1xf32, #tpu.memory_space<smem>>
    %49 = vector.broadcast %48 : f32 to vector<16x128xf32>
    %50 = arith.mulf %49, %29 : vector<16x128xf32>
    %51 = arith.addf %47, %50 : vector<16x128xf32>
    %52 = tpu.transpose %51, [1, 0] : vector<16x128xf32> -> vector<128x16xf32>
    %c0_25 = arith.constant 0 : index
    %c0_26 = arith.constant 0 : index
    %53 = vector.load %arg7[%c0_25, %c0_26] : memref<128x16xf32, #tpu.memory_space<vmem>>, vector<128x16xf32>
    tpu.vector_store %arg7[%c0_25, %c0_26], %52 {strides = array<i32>} : memref<128x16xf32, #tpu.memory_space<vmem>>, vector<128x16xf32>,
    return
  }
  func.func @transform_0(%arg0: i32) -> i32 {
    %c0_i32 = arith.constant 0 : i32
    %c0_i32_0 = arith.constant 0 : i32
    return %c0_i32 : i32
  }
  func.func @transform_1(%arg0: i32) -> (i32, i32) {
    %c0_i32 = arith.constant 0 : i32
    %c0_i32_0 = arith.constant 0 : i32
    return %arg0, %c0_i32 : i32, i32
  }
  func.func @transform_2(%arg0: i32) -> (i32, i32) {
    %c0_i32 = arith.constant 0 : i32
    %c0_i32_0 = arith.constant 0 : i32
    %c0_i32_1 = arith.constant 0 : i32
    return %c0_i32, %c0_i32_0 : i32, i32
  }
  func.func @transform_3(%arg0: i32) -> (i32, i32) {
    %c0_i32 = arith.constant 0 : i32
    %c0_i32_0 = arith.constant 0 : i32
    %c0_i32_1 = arith.constant 0 : i32
    return %c0_i32, %c0_i32_0 : i32, i32
  }
  func.func @transform_4(%arg0: i32) -> (i32, i32) {
    %c0_i32 = arith.constant 0 : i32
    %c0_i32_0 = arith.constant 0 : i32
    %c0_i32_1 = arith.constant 0 : i32
    return %c0_i32, %c0_i32_0 : i32, i32
  }
  func.func @transform_5(%arg0: i32) -> (i32, i32) {
    %c0_i32 = arith.constant 0 : i32
    %c0_i32_0 = arith.constant 0 : i32
    %c0_i32_1 = arith.constant 0 : i32
    return %c0_i32, %c0_i32_0 : i32, i32
  }
  func.func @transform_6(%arg0: i32) -> (i32, i32) {
    %c0_i32 = arith.constant 0 : i32
    %c0_i32_0 = arith.constant 0 : i32
    return %arg0, %c0_i32 : i32, i32
  }
}

</mosaic_0001>

<llo_original>
// kernel: mask_decoder_forward.1
$region0: #{mask_decoder_forward.1}
  #allocation0 [shape = 'u32[]', space=smem, size = 0x4, offset = 0x4, fixed_abs, tag = 'smem constant byte address 0x4 - core index']
  #allocation1 [shape = 'u32[144,128]{1,0:T(1,128)}', space=vmem, size = 0x12000, scoped, tag = 'internal scratch']
  #allocation2 [shape = 'f32[1]{0:T(128)S(6)}', space=smem, size = 0x200, scoped, tag = 'scoped memory for mask_decoder_forward.1']
  %s0 = inlined_call_operand.<no memory space> [shape: f32[1], index: 0, kind: input, shape index: {}]
  %s1 = inlined_call_operand.vmem [shape: f32[128,32], index: 1, kind: input, shape index: {}]
  %s2 = inlined_call_operand.vmem [shape: f32[16,32], index: 2, kind: input, shape index: {}]
  %s3 = inlined_call_operand.vmem [shape: f32[16,16], index: 3, kind: input, shape index: {}]
  %s4 = inlined_call_operand.vmem [shape: f32[16,16], index: 4, kind: input, shape index: {}]
  %s5 = inlined_call_operand.vmem [shape: f32[16,4], index: 5, kind: input, shape index: {}]
  %s6 = inlined_call_operand.vmem [shape: f32[128,16], index: 6, kind: output, shape index: {}]
  %s7 = sld [smem:[#allocation0]]
  $region34: #{mask_decoder_forward.1} parent=0
    _
  %s9 = ssub.s32 1, %s7
  %s10 = scalar_select 0, %s9, %s7
  %11 = sst [smem:[#allocation2]] %s0
  // Predicated region
  $region2: #{mask_decoder_forward.1} parent=0 // pred_check
    _
  $region3: #{mask_decoder_forward.1} parent=0 // pred_check_branch
    %13 = sbr.rel (0) target = $region5
  $region4: #{mask_decoder_forward.1} parent=0 // pred_region
    _
  $region5: #{mask_decoder_forward.1} parent=0 // pred_fallthru
    _
  // Predicated region
  $region6: #{mask_decoder_forward.1} parent=0 // pred_check
    _
  $region7: #{mask_decoder_forward.1} parent=0 // pred_check_branch
    %15 = sbr.rel (0) target = $region9
  $region8: #{mask_decoder_forward.1} parent=0 // pred_region
    _
  $region9: #{mask_decoder_forward.1} parent=0 // pred_fallthru
    _
  // Predicated region
  $region10: #{mask_decoder_forward.1} parent=0 // pred_check
    _
  $region11: #{mask_decoder_forward.1} parent=0 // pred_check_branch
    %17 = sbr.rel (0) target = $region13
  $region12: #{mask_decoder_forward.1} parent=0 // pred_region
    _
  $region13: #{mask_decoder_forward.1} parent=0 // pred_fallthru
    _
  // Predicated region
  $region14: #{mask_decoder_forward.1} parent=0 // pred_check
    _
  $region15: #{mask_decoder_forward.1} parent=0 // pred_check_branch
    %19 = sbr.rel (0) target = $region17
  $region16: #{mask_decoder_forward.1} parent=0 // pred_region
    _
  $region17: #{mask_decoder_forward.1} parent=0 // pred_fallthru
    _
  // Predicated region
  $region18: #{mask_decoder_forward.1} parent=0 // pred_check
    _
  $region19: #{mask_decoder_forward.1} parent=0 // pred_check_branch
    %21 = sbr.rel (0) target = $region21
  $region20: #{mask_decoder_forward.1} parent=0 // pred_region
    _
  $region21: #{mask_decoder_forward.1} parent=0 // pred_fallthru
    _
  // Predicated region
  $region22: #{mask_decoder_forward.1} parent=0 // pred_check
    _
  $region23: #{mask_decoder_forward.1} parent=0 // pred_check_branch
    %23 = sbr.rel (0) target = $region25
  $region24: #{mask_decoder_forward.1} parent=0 // pred_region
    _
  $region25: #{mask_decoder_forward.1} parent=0 // pred_fallthru
    _
  %v24 = vld [vmem:[%s1] sm:$0xff]
  %v25 = vld [vmem:[%s1 + $0x8] sm:$0xff]
  %v26 = vld [vmem:[%s1 + $0x10] sm:$0xff]
  %v27 = vld [vmem:[%s1 + $0x18] sm:$0xff]
  %v28 = vld [vmem:[%s1 + $0x20] sm:$0xff]
  %v29 = vld [vmem:[%s1 + $0x28] sm:$0xff]
  %v30 = vld [vmem:[%s1 + $0x30] sm:$0xff]
  %v31 = vld [vmem:[%s1 + $0x38] sm:$0xff]
  %v32 = vld [vmem:[%s1 + $0x40] sm:$0xff]
  %v33 = vld [vmem:[%s1 + $0x48] sm:$0xff]
  %v34 = vld [vmem:[%s1 + $0x50] sm:$0xff]
  %v35 = vld [vmem:[%s1 + $0x58] sm:$0xff]
  %v36 = vld [vmem:[%s1 + $0x60] sm:$0xff]
  %v37 = vld [vmem:[%s1 + $0x68] sm:$0xff]
  %v38 = vld [vmem:[%s1 + $0x70] sm:$0xff]
  %v39 = vld [vmem:[%s1 + $0x78] sm:$0xff]
  %vm40 = vcmask 261120
  %v42 = vsel %vm40, 0.03125, 0
  %v45 = vsel %vm40, %v24, 0
  %v48 = vsel %vm40, %v25, 0
  %v51 = vsel %vm40, %v26, 0
  %v54 = vsel %vm40, %v27, 0
  %v57 = vsel %vm40, %v28, 0
  %v60 = vsel %vm40, %v29, 0
  %v63 = vsel %vm40, %v30, 0
  %v66 = vsel %vm40, %v31, 0
  %v69 = vsel %vm40, %v32, 0
  %v72 = vsel %vm40, %v33, 0
  %v75 = vsel %vm40, %v34, 0
  %v78 = vsel %vm40, %v35, 0
  %v81 = vsel %vm40, %v36, 0
  %v84 = vsel %vm40, %v37, 0
  %v87 = vsel %vm40, %v38, 0
  %v90 = vsel %vm40, %v39, 0
  %92 = vmatprep.subr.mxu0 0.0
  %93 = vmatpush1.xpose.msra.mxu0 %v45
  %94 = vmatprep.subr.mxu0 0.0
  %95 = vmatpush1.xpose.msra.mxu0 %v48
  %96 = vmatprep.subr.mxu0 0.0
  %97 = vmatpush1.xpose.msra.mxu0 %v51
  %98 = vmatprep.subr.mxu0 0.0
  %99 = vmatpush1.xpose.msra.mxu0 %v54
  %100 = vmatprep.subr.mxu0 0.0
  %101 = vmatpush1.xpose.msra.mxu0 %v57
  %102 = vmatprep.subr.mxu0 0.0
  %103 = vmatpush1.xpose.msra.mxu0 %v60
  %104 = vmatprep.subr.mxu0 0.0
  %105 = vmatpush1.xpose.msra.mxu0 %v63
  %106 = vmatprep.subr.mxu0 0.0
  %107 = vmatpush1.xpose.msra.mxu0 %v66
  %108 = vmatprep.subr.mxu0 0.0
  %109 = vmatpush1.xpose.msra.mxu0 %v69
  %110 = vmatprep.subr.mxu0 0.0
  %111 = vmatpush1.xpose.msra.mxu0 %v72
  %112 = vmatprep.subr.mxu0 0.0
  %113 = vmatpush1.xpose.msra.mxu0 %v75
  %114 = vmatprep.subr.mxu0 0.0
  %115 = vmatpush1.xpose.msra.mxu0 %v78
  %116 = vmatprep.subr.mxu0 0.0
  %117 = vmatpush1.xpose.msra.mxu0 %v81
  %118 = vmatprep.subr.mxu0 0.0
  %119 = vmatpush1.xpose.msra.mxu0 %v84
  %120 = vmatprep.subr.mxu0 0.0
  %121 = vmatpush1.xpose.msra.mxu0 %v87
  %122 = vmatprep.subr.mxu0 0.0
  %123 = vmatpush1.xpose.msra.mxu0 %v90
  %124 = vmatprep.subr.mxu0 0.0
  %125 = vmatpush1.xpose.msra.mxu0 0.0
  %126 = vmatprep.subr.mxu0 0.0
  %127 = vmatpush1.xpose.msra.mxu0 0.0
  %128 = vmatprep.subr.mxu0 0.0
  %129 = vmatpush1.xpose.msra.mxu0 0.0
  %130 = vmatprep.subr.mxu0 0.0
  %131 = vmatpush1.xpose.msra.mxu0 0.0
  %132 = vmatprep.subr.mxu0 0.0
  %133 = vmatpush1.xpose.msra.mxu0 0.0
  %134 = vmatprep.subr.mxu0 0.0
  %135 = vmatpush1.xpose.msra.mxu0 0.0
  %136 = vmatprep.subr.mxu0 0.0
  %137 = vmatpush1.xpose.msra.mxu0 0.0
  %138 = vmatprep.subr.mxu0 0.0
  %139 = vmatpush1.xpose.msra.mxu0 0.0
  %140 = vmatprep.subr.mxu0 0.0
  %141 = vmatpush1.xpose.msra.mxu0 0.0
  %142 = vmatprep.subr.mxu0 0.0
  %143 = vmatpush1.xpose.msra.mxu0 0.0
  %144 = vmatprep.subr.mxu0 0.0
  %145 = vmatpush1.xpose.msra.mxu0 0.0
  %146 = vmatprep.subr.mxu0 0.0
  %147 = vmatpush1.xpose.msra.mxu0 0.0
  %148 = vmatprep.subr.mxu0 0.0
  %149 = vmatpush1.xpose.msra.mxu0 0.0
  %150 = vmatprep.subr.mxu0 0.0
  %151 = vmatpush1.xpose.msra.mxu0 0.0
  %152 = vmatprep.subr.mxu0 0.0
  %153 = vmatpush1.xpose.msra.mxu0 0.0
  %154 = vmatprep.subr.mxu0 0.0
  %155 = vmatpush1.xpose.msra.mxu0 0.0
  %156 = vmatprep.mubr.f32.mxu0 0.0
  %157 = vmatmul.mubr.f32.gmra.mrb[0].mxu0 %v42
  %v158 = vpop.f32.mrb[0].mxu0
  %v159 = vadd.f32 0.0, %v158
  %v160 = vpop.f32.mrb[0].mxu0
  %161 = vdwg.mxu0
  %v162 = vmul.f32 %v24, %v24
  %v163 = vmul.f32 %v25, %v25
  %v164 = vmul.f32 %v26, %v26
  %v165 = vmul.f32 %v27, %v27
  %v166 = vmul.f32 %v28, %v28
  %v167 = vmul.f32 %v29, %v29
  %v168 = vmul.f32 %v30, %v30
  %v169 = vmul.f32 %v31, %v31
  %v170 = vmul.f32 %v32, %v32
  %v171 = vmul.f32 %v33, %v33
  %v172 = vmul.f32 %v34, %v34
  %v173 = vmul.f32 %v35, %v35
  %v174 = vmul.f32 %v36, %v36
  %v175 = vmul.f32 %v37, %v37
  %v176 = vmul.f32 %v38, %v38
  %v177 = vmul.f32 %v39, %v39
  %v179 = vsel %vm40, %v162, 0
  %v182 = vsel %vm40, %v163, 0
  %v185 = vsel %vm40, %v164, 0
  %v188 = vsel %vm40, %v165, 0
  %v191 = vsel %vm40, %v166, 0
  %v194 = vsel %vm40, %v167, 0
  %v197 = vsel %vm40, %v168, 0
  %v200 = vsel %vm40, %v169, 0
  %v203 = vsel %vm40, %v170, 0
  %v206 = vsel %vm40, %v171, 0
  %v209 = vsel %vm40, %v172, 0
  %v212 = vsel %vm40, %v173, 0
  %v215 = vsel %vm40, %v174, 0
  %v218 = vsel %vm40, %v175, 0
  %v221 = vsel %vm40, %v176, 0
  %v224 = vsel %vm40, %v177, 0
  %226 = vmatprep.subr.mxu0 0.0
  %227 = vmatpush1.xpose.msra.mxu0 %v179
  %228 = vmatprep.subr.mxu0 0.0
  %229 = vmatpush1.xpose.msra.mxu0 %v182
  %230 = vmatprep.subr.mxu0 0.0
  %231 = vmatpush1.xpose.msra.mxu0 %v185
  %232 = vmatprep.subr.mxu0 0.0
  %233 = vmatpush1.xpose.msra.mxu0 %v188
  %234 = vmatprep.subr.mxu0 0.0
  %235 = vmatpush1.xpose.msra.mxu0 %v191
  %236 = vmatprep.subr.mxu0 0.0
  %237 = vmatpush1.xpose.msra.mxu0 %v194
  %238 = vmatprep.subr.mxu0 0.0
  %239 = vmatpush1.xpose.msra.mxu0 %v197
  %240 = vmatprep.subr.mxu0 0.0
  %241 = vmatpush1.xpose.msra.mxu0 %v200
  %242 = vmatprep.subr.mxu0 0.0
  %243 = vmatpush1.xpose.msra.mxu0 %v203
  %244 = vmatprep.subr.mxu0 0.0
  %245 = vmatpush1.xpose.msra.mxu0 %v206
  %246 = vmatprep.subr.mxu0 0.0
  %247 = vmatpush1.xpose.msra.mxu0 %v209
  %248 = vmatprep.subr.mxu0 0.0
  %249 = vmatpush1.xpose.msra.mxu0 %v212
  %250 = vmatprep.subr.mxu0 0.0
  %251 = vmatpush1.xpose.msra.mxu0 %v215
  %252 = vmatprep.subr.mxu0 0.0
  %253 = vmatpush1.xpose.msra.mxu0 %v218
  %254 = vmatprep.subr.mxu0 0.0
  %255 = vmatpush1.xpose.msra.mxu0 %v221
  %256 = vmatprep.subr.mxu0 0.0
  %257 = vmatpush1.xpose.msra.mxu0 %v224
  %258 = vmatprep.subr.mxu0 0.0
  %259 = vmatpush1.xpose.msra.mxu0 0.0
  %260 = vmatprep.subr.mxu0 0.0
  %261 = vmatpush1.xpose.msra.mxu0 0.0
  %262 = vmatprep.subr.mxu0 0.0
  %263 = vmatpush1.xpose.msra.mxu0 0.0
  %264 = vmatprep.subr.mxu0 0.0
  %265 = vmatpush1.xpose.msra.mxu0 0.0
  %266 = vmatprep.subr.mxu0 0.0
  %267 = vmatpush1.xpose.msra.mxu0 0.0
  %268 = vmatprep.subr.mxu0 0.0
  %269 = vmatpush1.xpose.msra.mxu0 0.0
  %270 = vmatprep.subr.mxu0 0.0
  %271 = vmatpush1.xpose.msra.mxu0 0.0
  %272 = vmatprep.subr.mxu0 0.0
  %273 = vmatpush1.xpose.msra.mxu0 0.0
  %274 = vmatprep.subr.mxu0 0.0
  %275 = vmatpush1.xpose.msra.mxu0 0.0
  %276 = vmatprep.subr.mxu0 0.0
  %277 = vmatpush1.xpose.msra.mxu0 0.0
  %278 = vmatprep.subr.mxu0 0.0
  %279 = vmatpush1.xpose.msra.mxu0 0.0
  %280 = vmatprep.subr.mxu0 0.0
  %281 = vmatpush1.xpose.msra.mxu0 0.0
  %282 = vmatprep.subr.mxu0 0.0
  %283 = vmatpush1.xpose.msra.mxu0 0.0
  %284 = vmatprep.subr.mxu0 0.0
  %285 = vmatpush1.xpose.msra.mxu0 0.0
  %286 = vmatprep.subr.mxu0 0.0
  %287 = vmatpush1.xpose.msra.mxu0 0.0
  %288 = vmatprep.subr.mxu0 0.0
  %289 = vmatpush1.xpose.msra.mxu0 0.0
  %290 = vmatprep.mubr.f32.mxu0 0.0
  %291 = vmatmul.mubr.f32.gmra.mrb[0].mxu0 %v42
  %v292 = vpop.f32.mrb[0].mxu0
  %v293 = vadd.f32 0.0, %v292
  %v294 = vpop.f32.mrb[0].mxu0
  %295 = vdwg.mxu0
  %v296 = vmul.f32 %v159, %v159
  %v297 = vsub.f32 %v293, %v296
  %v298 = vadd.f32 %v297, 1e-05
  %v299 = vrsqrt.pop %v298
  %v300 = vld [vmem:[%s2] sm:$0xff]
  %v301 = vld [vmem:[%s2 + $0x8] sm:$0xff]
  %v303 = vsel %vm40, %v300, 0
  %v306 = vsel %vm40, %v301, 0
  %308 = vmatprep.subr.mxu0 0.0
  %309 = vmatpush1.xpose.msra.mxu0 %v45
  %310 = vmatprep.subr.mxu0 0.0
  %311 = vmatpush1.xpose.msra.mxu0 %v48
  %312 = vmatprep.subr.mxu0 0.0
  %313 = vmatpush1.xpose.msra.mxu0 %v51
  %314 = vmatprep.subr.mxu0 0.0
  %315 = vmatpush1.xpose.msra.mxu0 %v54
  %316 = vmatprep.subr.mxu0 0.0
  %317 = vmatpush1.xpose.msra.mxu0 %v57
  %318 = vmatprep.subr.mxu0 0.0
  %319 = vmatpush1.xpose.msra.mxu0 %v60
  %320 = vmatprep.subr.mxu0 0.0
  %321 = vmatpush1.xpose.msra.mxu0 %v63
  %322 = vmatprep.subr.mxu0 0.0
  %323 = vmatpush1.xpose.msra.mxu0 %v66
  %324 = vmatprep.subr.mxu0 0.0
  %325 = vmatpush1.xpose.msra.mxu0 %v69
  %326 = vmatprep.subr.mxu0 0.0
  %327 = vmatpush1.xpose.msra.mxu0 %v72
  %328 = vmatprep.subr.mxu0 0.0
  %329 = vmatpush1.xpose.msra.mxu0 %v75
  %330 = vmatprep.subr.mxu0 0.0
  %331 = vmatpush1.xpose.msra.mxu0 %v78
  %332 = vmatprep.subr.mxu0 0.0
  %333 = vmatpush1.xpose.msra.mxu0 %v81
  %334 = vmatprep.subr.mxu0 0.0
  %335 = vmatpush1.xpose.msra.mxu0 %v84
  %336 = vmatprep.subr.mxu0 0.0
  %337 = vmatpush1.xpose.msra.mxu0 %v87
  %338 = vmatprep.subr.mxu0 0.0
  %339 = vmatpush1.xpose.msra.mxu0 %v90
  %340 = vmatprep.subr.mxu0 0.0
  %341 = vmatpush1.xpose.msra.mxu0 0.0
  %342 = vmatprep.subr.mxu0 0.0
  %343 = vmatpush1.xpose.msra.mxu0 0.0
  %344 = vmatprep.subr.mxu0 0.0
  %345 = vmatpush1.xpose.msra.mxu0 0.0
  %346 = vmatprep.subr.mxu0 0.0
  %347 = vmatpush1.xpose.msra.mxu0 0.0
  %348 = vmatprep.subr.mxu0 0.0
  %349 = vmatpush1.xpose.msra.mxu0 0.0
  %350 = vmatprep.subr.mxu0 0.0
  %351 = vmatpush1.xpose.msra.mxu0 0.0
  %352 = vmatprep.subr.mxu0 0.0
  %353 = vmatpush1.xpose.msra.mxu0 0.0
  %354 = vmatprep.subr.mxu0 0.0
  %355 = vmatpush1.xpose.msra.mxu0 0.0
  %356 = vmatprep.subr.mxu0 0.0
  %357 = vmatpush1.xpose.msra.mxu0 0.0
  %358 = vmatprep.subr.mxu0 0.0
  %359 = vmatpush1.xpose.msra.mxu0 0.0
  %360 = vmatprep.subr.mxu0 0.0
  %361 = vmatpush1.xpose.msra.mxu0 0.0
  %362 = vmatprep.subr.mxu0 0.0
  %363 = vmatpush1.xpose.msra.mxu0 0.0
  %364 = vmatprep.subr.mxu0 0.0
  %365 = vmatpush1.xpose.msra.mxu0 0.0
  %366 = vmatprep.subr.mxu0 0.0
  %367 = vmatpush1.xpose.msra.mxu0 0.0
  %368 = vmatprep.subr.mxu0 0.0
  %369 = vmatpush1.xpose.msra.mxu0 0.0
  %370 = vmatprep.subr.mxu0 0.0
  %371 = vmatpush1.xpose.msra.mxu0 0.0
  %372 = vmatprep.mubr.f32.mxu0 0.0
  %373 = vmatmul.mubr.f32.gmra.mrb[0].mxu0 %v303
  %v374 = vpop.f32.mrb[0].mxu0
  %v375 = vadd.f32 0.0, %v374
  %v376 = vpop.f32.mrb[0].mxu0
  %377 = vmatprep.mubr.f32.mxu0 0.0
  %378 = vmatmul.mubr.f32.gmra.mrb[0].mxu0 %v306
  %v379 = vpop.f32.mrb[0].mxu0
  %v380 = vadd.f32 0.0, %v379
  %v381 = vpop.f32.mrb[0].mxu0
  %382 = vdwg.mxu0
  %v383 = vld [vmem:[%s5] sm:$0xff]
  %v384 = vld [vmem:[%s5 + $0x8] sm:$0xff]
  %386 = vset.pattern.permute.xlu0 3
  %387 = vperm.xlu0 %386, %v383
  %v388 = vpop.permute.xlu0 %387
  %391 = vset.pattern.permute.xlu0 3
  %392 = vperm.xlu0 %391, %v384
  %v393 = vpop.permute.xlu0 %392
  %v395 = vlaneseq
  %v396 = vshrl.u32 %v395, 7
  %v397 = vsub.s32 0, %v396
  %v398 = vrot.slane %v159, %v397
  %v399 = vmul.f32 %v388, %v398
  %v400 = vmul.f32 %v393, %v398
  %v401 = vsub.f32 %v375, %v399
  %v402 = vsub.f32 %v380, %v400
  %v403 = vlaneseq
  %v404 = vshrl.u32 %v403, 7
  %v405 = vsub.s32 0, %v404
  %v406 = vrot.slane %v299, %v405
  %v407 = vmul.f32 %v401, %v406
  %v408 = vmul.f32 %v402, %v406
  %409 = vset.pattern.permute.xlu0 0
  %410 = vperm.xlu0 %409, %v383
  %v411 = vpop.permute.xlu0 %410
  %413 = vset.pattern.permute.xlu0 0
  %414 = vperm.xlu0 %413, %v384
  %v415 = vpop.permute.xlu0 %414
  %v417 = vadd.f32 %v407, %v411
  %v418 = vadd.f32 %v408, %v415
  %v419 = vmul.f32 %v417, 0.5
  %v420 = vmul.f32 %v418, 0.5
  %v421 = vmul.f32 %v417, 0.70710677
  %v422 = vmul.f32 %v418, 0.70710677
  %v423 = verf.f32.pop %v421
  %v424 = verf.f32.pop %v422
  %v425 = vadd.f32 %v423, 1.0
  %v426 = vadd.f32 %v424, 1.0
  %v427 = vmul.f32 %v419, %v425
  %v428 = vmul.f32 %v420, %v426
  %v429 = vld [vmem:[%s3] sm:$0xff]
  %v430 = vld [vmem:[%s3 + $0x8] sm:$0xff]
  %431 = vset.pattern.permute.xlu0 1
  %432 = vperm.xlu0 %431, %v383
  %v433 = vpop.permute.xlu0 %432
  %435 = vset.pattern.permute.xlu0 1
  %436 = vperm.xlu0 %435, %v384
  %v437 = vpop.permute.xlu0 %436
  %vm439 = vcmask 130048
  %v441 = vsel %vm439, %v429, 0
  %v444 = vsel %vm439, %v430, 0
  %446 = vmatprep.subr.mxu0 0.0
  %447 = vmatpush1.msra.mxu0 %v427
  %448 = vmatprep.subr.mxu0 0.0
  %449 = vmatpush1.msra.mxu0 %v428
  %450 = vmatprep.subr.mxu0 0.0
  %451 = vmatpush1.msra.mxu0 0.0
  %452 = vmatprep.subr.mxu0 0.0
  %453 = vmatpush1.msra.mxu0 0.0
  %454 = vmatprep.subr.mxu0 0.0
  %455 = vmatpush1.msra.mxu0 0.0
  %456 = vmatprep.subr.mxu0 0.0
  %457 = vmatpush1.msra.mxu0 0.0
  %458 = vmatprep.subr.mxu0 0.0
  %459 = vmatpush1.msra.mxu0 0.0
  %460 = vmatprep.subr.mxu0 0.0
  %461 = vmatpush1.msra.mxu0 0.0
  %462 = vmatprep.subr.mxu0 0.0
  %463 = vmatpush1.msra.mxu0 0.0
  %464 = vmatprep.subr.mxu0 0.0
  %465 = vmatpush1.msra.mxu0 0.0
  %466 = vmatprep.subr.mxu0 0.0
  %467 = vmatpush1.msra.mxu0 0.0
  %468 = vmatprep.subr.mxu0 0.0
  %469 = vmatpush1.msra.mxu0 0.0
  %470 = vmatprep.subr.mxu0 0.0
  %471 = vmatpush1.msra.mxu0 0.0
  %472 = vmatprep.subr.mxu0 0.0
  %473 = vmatpush1.msra.mxu0 0.0
  %474 = vmatprep.subr.mxu0 0.0
  %475 = vmatpush1.msra.mxu0 0.0
  %476 = vmatprep.subr.mxu0 0.0
  %477 = vmatpush1.msra.mxu0 0.0
  %478 = vmatprep.subr.mxu0 0.0
  %479 = vmatpush1.msra.mxu0 0.0
  %480 = vmatprep.subr.mxu0 0.0
  %481 = vmatpush1.msra.mxu0 0.0
  %482 = vmatprep.subr.mxu0 0.0
  %483 = vmatpush1.msra.mxu0 0.0
  %484 = vmatprep.subr.mxu0 0.0
  %485 = vmatpush1.msra.mxu0 0.0
  %486 = vmatprep.subr.mxu0 0.0
  %487 = vmatpush1.msra.mxu0 0.0
  %488 = vmatprep.subr.mxu0 0.0
  %489 = vmatpush1.msra.mxu0 0.0
  %490 = vmatprep.subr.mxu0 0.0
  %491 = vmatpush1.msra.mxu0 0.0
  %492 = vmatprep.subr.mxu0 0.0
  %493 = vmatpush1.msra.mxu0 0.0
  %494 = vmatprep.subr.mxu0 0.0
  %495 = vmatpush1.msra.mxu0 0.0
  %496 = vmatprep.subr.mxu0 0.0
  %497 = vmatpush1.msra.mxu0 0.0
  %498 = vmatprep.subr.mxu0 0.0
  %499 = vmatpush1.msra.mxu0 0.0
  %500 = vmatprep.subr.mxu0 0.0
  %501 = vmatpush1.msra.mxu0 0.0
  %502 = vmatprep.subr.mxu0 0.0
  %503 = vmatpush1.msra.mxu0 0.0
  %504 = vmatprep.subr.mxu0 0.0
  %505 = vmatpush1.msra.mxu0 0.0
  %506 = vmatprep.subr.mxu0 0.0
  %507 = vmatpush1.msra.mxu0 0.0
  %508 = vmatprep.subr.mxu0 0.0
  %509 = vmatpush1.msra.mxu0 0.0
  %510 = vmatprep.mubr.f32.mxu0 0.0
  %511 = vmatmul.mubr.f32.gmra.mrb[0].mxu0 %v441
  %v512 = vpop.f32.mrb[0].mxu0
  %v513 = vadd.f32 %v433, %v512
  %v514 = vpop.f32.mrb[0].mxu0
  %515 = vmatprep.mubr.f32.mxu0 0.0
  %516 = vmatmul.mubr.f32.gmra.mrb[0].mxu0 %v444
  %v517 = vpop.f32.mrb[0].mxu0
  %v518 = vadd.f32 %v437, %v517
  %v519 = vpop.f32.mrb[0].mxu0
  %520 = vdwg.mxu0
  %v521 = vmul.f32 %v513, 0.5
  %v522 = vmul.f32 %v518, 0.5
  %v523 = vmul.f32 %v513, 0.70710677
  %v524 = vmul.f32 %v518, 0.70710677
  %v525 = verf.f32.pop %v523
  %v526 = verf.f32.pop %v524
  %v527 = vadd.f32 %v525, 1.0
  %v528 = vadd.f32 %v526, 1.0
  %v529 = vmul.f32 %v521, %v527
  %v530 = vmul.f32 %v522, %v528
  %v531 = vld [vmem:[%s4] sm:$0xff]
  %v532 = vld [vmem:[%s4 + $0x8] sm:$0xff]
  %533 = vset.pattern.permute.xlu0 2
  %534 = vperm.xlu0 %533, %v383
  %v535 = vpop.permute.xlu0 %534
  %537 = vset.pattern.permute.xlu0 2
  %538 = vperm.xlu0 %537, %v384
  %v539 = vpop.permute.xlu0 %538
  %v542 = vsel %vm439, %v531, 0
  %v545 = vsel %vm439, %v532, 0
  %547 = vmatprep.subr.mxu0 0.0
  %548 = vmatpush1.msra.mxu0 %v529
  %549 = vmatprep.subr.mxu0 0.0
  %550 = vmatpush1.msra.mxu0 %v530
  %551 = vmatprep.subr.mxu0 0.0
  %552 = vmatpush1.msra.mxu0 0.0
  %553 = vmatprep.subr.mxu0 0.0
  %554 = vmatpush1.msra.mxu0 0.0
  %555 = vmatprep.subr.mxu0 0.0
  %556 = vmatpush1.msra.mxu0 0.0
  %557 = vmatprep.subr.mxu0 0.0
  %558 = vmatpush1.msra.mxu0 0.0
  %559 = vmatprep.subr.mxu0 0.0
  %560 = vmatpush1.msra.mxu0 0.0
  %561 = vmatprep.subr.mxu0 0.0
  %562 = vmatpush1.msra.mxu0 0.0
  %563 = vmatprep.subr.mxu0 0.0
  %564 = vmatpush1.msra.mxu0 0.0
  %565 = vmatprep.subr.mxu0 0.0
  %566 = vmatpush1.msra.mxu0 0.0
  %567 = vmatprep.subr.mxu0 0.0
  %568 = vmatpush1.msra.mxu0 0.0
  %569 = vmatprep.subr.mxu0 0.0
  %570 = vmatpush1.msra.mxu0 0.0
  %571 = vmatprep.subr.mxu0 0.0
  %572 = vmatpush1.msra.mxu0 0.0
  %573 = vmatprep.subr.mxu0 0.0
  %574 = vmatpush1.msra.mxu0 0.0
  %575 = vmatprep.subr.mxu0 0.0
  %576 = vmatpush1.msra.mxu0 0.0
  %577 = vmatprep.subr.mxu0 0.0
  %578 = vmatpush1.msra.mxu0 0.0
  %579 = vmatprep.subr.mxu0 0.0
  %580 = vmatpush1.msra.mxu0 0.0
  %581 = vmatprep.subr.mxu0 0.0
  %582 = vmatpush1.msra.mxu0 0.0
  %583 = vmatprep.subr.mxu0 0.0
  %584 = vmatpush1.msra.mxu0 0.0
  %585 = vmatprep.subr.mxu0 0.0
  %586 = vmatpush1.msra.mxu0 0.0
  %587 = vmatprep.subr.mxu0 0.0
  %588 = vmatpush1.msra.mxu0 0.0
  %589 = vmatprep.subr.mxu0 0.0
  %590 = vmatpush1.msra.mxu0 0.0
  %591 = vmatprep.subr.mxu0 0.0
  %592 = vmatpush1.msra.mxu0 0.0
  %593 = vmatprep.subr.mxu0 0.0
  %594 = vmatpush1.msra.mxu0 0.0
  %595 = vmatprep.subr.mxu0 0.0
  %596 = vmatpush1.msra.mxu0 0.0
  %597 = vmatprep.subr.mxu0 0.0
  %598 = vmatpush1.msra.mxu0 0.0
  %599 = vmatprep.subr.mxu0 0.0
  %600 = vmatpush1.msra.mxu0 0.0
  %601 = vmatprep.subr.mxu0 0.0
  %602 = vmatpush1.msra.mxu0 0.0
  %603 = vmatprep.subr.mxu0 0.0
  %604 = vmatpush1.msra.mxu0 0.0
  %605 = vmatprep.subr.mxu0 0.0
  %606 = vmatpush1.msra.mxu0 0.0
  %607 = vmatprep.subr.mxu0 0.0
  %608 = vmatpush1.msra.mxu0 0.0
  %609 = vmatprep.subr.mxu0 0.0
  %610 = vmatpush1.msra.mxu0 0.0
  %611 = vmatprep.mubr.f32.mxu0 0.0
  %612 = vmatmul.mubr.f32.gmra.mrb[0].mxu0 %v542
  %v613 = vpop.f32.mrb[0].mxu0
  %v614 = vadd.f32 %v535, %v613
  %v615 = vpop.f32.mrb[0].mxu0
  %616 = vmatprep.mubr.f32.mxu0 0.0
  %617 = vmatmul.mubr.f32.gmra.mrb[0].mxu0 %v545
  %v618 = vpop.f32.mrb[0].mxu0
  %v619 = vadd.f32 %v539, %v618
  %v620 = vpop.f32.mrb[0].mxu0
  %621 = vdwg.mxu0
  %s622 = sld [smem:[#allocation2]]
  %v623 = vstv %s622
  %v624 = vmul.f32 %v623, %v427
  %v625 = vmul.f32 %v623, %v428
  %v626 = vadd.f32 %v614, %v624
  %v627 = vadd.f32 %v619, %v625
  %628 = vxpose.xlu0.b32.start [1/16] %v626, 128
  %629 = vxpose.xlu0.b32.cont [2/16] %v627, 128
  %630 = vxpose.xlu0.b32.cont [3/16] 0.0, 128
  %631 = vxpose.xlu0.b32.cont [4/16] 0.0, 128
  %632 = vxpose.xlu0.b32.cont [5/16] 0.0, 128
  %633 = vxpose.xlu0.b32.cont [6/16] 0.0, 128
  %634 = vxpose.xlu0.b32.cont [7/16] 0.0, 128
  %635 = vxpose.xlu0.b32.cont [8/16] 0.0, 128
  %636 = vxpose.xlu0.b32.cont [9/16] 0.0, 128
  %637 = vxpose.xlu0.b32.cont [10/16] 0.0, 128
  %638 = vxpose.xlu0.b32.cont [11/16] 0.0, 128
  %639 = vxpose.xlu0.b32.cont [12/16] 0.0, 128
  %640 = vxpose.xlu0.b32.cont [13/16] 0.0, 128
  %641 = vxpose.xlu0.b32.cont [14/16] 0.0, 128
  %642 = vxpose.xlu0.b32.cont [15/16] 0.0, 128
  %643 = vxpose.xlu0.b32.end [16/16] 0.0, 128
  %v644 = vpop.trf.xlu0
  %v645 = vpop.trf.xlu0
  %v646 = vpop.trf.xlu0
  %v647 = vpop.trf.xlu0
  %v648 = vpop.trf.xlu0
  %v649 = vpop.trf.xlu0
  %v650 = vpop.trf.xlu0
  %v651 = vpop.trf.xlu0
  %v652 = vpop.trf.xlu0
  %v653 = vpop.trf.xlu0
  %v654 = vpop.trf.xlu0
  %v655 = vpop.trf.xlu0
  %v656 = vpop.trf.xlu0
  %v657 = vpop.trf.xlu0
  %v658 = vpop.trf.xlu0
  %v659 = vpop.trf.xlu0
  %660 = vst.msk [vmem:[%s6] sm:$0xff] %vm439, %v644
  %661 = vst.msk [vmem:[%s6 + $0x8] sm:$0xff] %vm439, %v645
  %662 = vst.msk [vmem:[%s6 + $0x10] sm:$0xff] %vm439, %v646
  %663 = vst.msk [vmem:[%s6 + $0x18] sm:$0xff] %vm439, %v647
  %664 = vst.msk [vmem:[%s6 + $0x20] sm:$0xff] %vm439, %v648
  %665 = vst.msk [vmem:[%s6 + $0x28] sm:$0xff] %vm439, %v649
  %666 = vst.msk [vmem:[%s6 + $0x30] sm:$0xff] %vm439, %v650
  %667 = vst.msk [vmem:[%s6 + $0x38] sm:$0xff] %vm439, %v651
  %668 = vst.msk [vmem:[%s6 + $0x40] sm:$0xff] %vm439, %v652
  %669 = vst.msk [vmem:[%s6 + $0x48] sm:$0xff] %vm439, %v653
  %670 = vst.msk [vmem:[%s6 + $0x50] sm:$0xff] %vm439, %v654
  %671 = vst.msk [vmem:[%s6 + $0x58] sm:$0xff] %vm439, %v655
  %672 = vst.msk [vmem:[%s6 + $0x60] sm:$0xff] %vm439, %v656
  %673 = vst.msk [vmem:[%s6 + $0x68] sm:$0xff] %vm439, %v657
  %674 = vst.msk [vmem:[%s6 + $0x70] sm:$0xff] %vm439, %v658
  %675 = vst.msk [vmem:[%s6 + $0x78] sm:$0xff] %vm439, %v659
  // Predicated region
  $region26: #{mask_decoder_forward.1} parent=0 // pred_check
    _
  $region27: #{mask_decoder_forward.1} parent=0 // pred_check_branch
    %677 = sbr.rel (0) target = $region29
  $region28: #{mask_decoder_forward.1} parent=0 // pred_region
    _
  $region29: #{mask_decoder_forward.1} parent=0 // pred_fallthru
    _
  // Predicated region
  $region30: #{mask_decoder_forward.1} parent=0 // pred_check
    _
  $region31: #{mask_decoder_forward.1} parent=0 // pred_check_branch
    %679 = sbr.rel (0) target = $region33
  $region32: #{mask_decoder_forward.1} parent=0 // pred_region
    _
  $region33: #{mask_decoder_forward.1} parent=0 // pred_fallthru
    _

</llo_original>
